<compile_context>
chip_gen: v5e
topology: v5e:2x2
jax: 0.10.0
libtpu: 0.0.40
codegen_flags: <defaults>
</compile_context>

<pallas_src>
import jax
import jax.numpy as jnp
from jax.experimental import pallas as pl
from jax.experimental.pallas import tpu as pltpu


def _round_up(x, m):
    return ((x + m - 1) // m) * m


def _sgc_linear_kernel(x_ref, w_ref, b_ref, o_ref):
    # (TM, nfeat_p) @ (nfeat_p, nclass_p) on the MXU, f32 accumulation,
    # bias broadcast over rows, store lane-dense f32 output tile.
    acc = jnp.dot(x_ref[...], w_ref[...], preferred_element_type=jnp.float32)
    o_ref[...] = (acc + b_ref[...]).astype(o_ref.dtype)


def prepare_sgc_params(weight, bias):
    """One-time parameter prep (do NOT redo per forward call).

    weight: (nclass, nfeat) float32  (PyTorch nn.Linear layout)
    bias:   (nclass,)       float32
    returns:
      w_t_p: (nfeat_p, nclass_p) bfloat16   transposed + zero-padded
      b_p:   (1, nclass_p)       float32    zero-padded
      nclass: original class count (for slicing the output)
    """
    nclass, nfeat = weight.shape
    nfeat_p = _round_up(nfeat, 128)
    nclass_p = _round_up(nclass, 128)
    w_t_p = jnp.pad(
        weight.T.astype(jnp.bfloat16),
        ((0, nfeat_p - nfeat), (0, nclass_p - nclass)),
    )
    b_p = jnp.pad(bias.astype(jnp.float32), (0, nclass_p - nclass)).reshape(1, nclass_p)
    return w_t_p, b_p, nclass


def sgc_forward(x, w_t_p, b_p, nclass, *, tm=512):
    """SGC forward: x @ weight.T + bias  (PyTorch nn.Linear semantics).

    x:      (N, nfeat) float32
    w_t_p:  (nfeat_p, nclass_p) bfloat16  from prepare_sgc_params
    b_p:    (1, nclass_p) float32         from prepare_sgc_params
    returns (N, nclass) float32
    """
    n, nfeat = x.shape
    nfeat_p, nclass_p = w_t_p.shape

    # Row tile: multiple of 8 (sublane), capped at `tm`, shrunk for tiny N.
    tm_eff = min(tm, _round_up(max(n, 1), 8))
    n_p = _round_up(n, tm_eff)

    # Pad rows to a multiple of the tile and features to a multiple of 128;
    # cast the streamed operand to bf16 to halve HBM traffic.
    x_p = jnp.pad(
        x.astype(jnp.bfloat16),
        ((0, n_p - n), (0, nfeat_p - nfeat)),
    )

    grid = (n_p // tm_eff,)

    cost = pl.CostEstimate(
        flops=2 * n_p * nfeat_p * nclass_p,
        transcendentals=0,
        bytes_accessed=(
            n_p * nfeat_p * 2          # x  (bf16)
            + nfeat_p * nclass_p * 2   # w  (bf16, resident)
            + nclass_p * 4             # bias (f32)
            + n_p * nclass_p * 4       # out (f32)
        ),
    )

    out_p = pl.pallas_call(
        _sgc_linear_kernel,
        out_shape=jax.ShapeDtypeStruct((n_p, nclass_p), jnp.float32),
        grid_spec=pltpu.PrefetchScalarGridSpec(
            num_scalar_prefetch=0,
            grid=grid,
            in_specs=[
                # x: one row-tile per grid step (double-buffered by Pallas).
                pl.BlockSpec((tm_eff, nfeat_p), lambda i: (i, 0)),
                # weight / bias: same block every step -> stay resident in VMEM.
                pl.BlockSpec((nfeat_p, nclass_p), lambda i: (0, 0)),
                pl.BlockSpec((1, nclass_p), lambda i: (0, 0)),
            ],
            out_specs=pl.BlockSpec((tm_eff, nclass_p), lambda i: (i, 0)),
        ),
        compiler_params=pltpu.CompilerParams(
            # Row tiles are independent: shard across TensorCores on v7x.
            dimension_semantics=("parallel",),
        ),
        cost_estimate=cost,
    )(x_p, w_t_p, b_p)

    # Strip row/class padding.
    return out_p[:n, :nclass]


def sgc_reference_f32(x, weight, bias):
    return x @ weight.T + bias


def sgc_reference_bf16(x, weight, bias):
    xb = x.astype(jnp.bfloat16).astype(jnp.float32)
    wb = weight.astype(jnp.bfloat16).astype(jnp.float32)
    return xb @ wb.T + bias


if __name__ == "__main__":
    # Small shapes consistent with the module: N nodes, nfeat features, nclass classes.
    N, NFEAT, NCLASS = 8, 32, 16

    key = jax.random.PRNGKey(0)
    kx, kw, kb = jax.random.split(key, 3)

    x = jax.random.normal(kx, (N, NFEAT), dtype=jnp.float32)
    # Deterministic "nn.Linear(nfeat, nclass)" parameters (synthetic init).
    weight = jax.random.normal(kw, (NCLASS, NFEAT), dtype=jnp.float32) * 0.1
    bias = jax.random.normal(kb, (NCLASS,), dtype=jnp.float32) * 0.1

    # One-time parameter preparation (transpose + pad + bf16 cast).
    w_t_p, b_p, nclass = prepare_sgc_params(weight, bias)

    out = sgc_forward(x, w_t_p, b_p, nclass)
    out = jax.block_until_ready(out)
    assert out.shape == (N, NCLASS)

    # Tight check against a bf16-input reference (same quantization of inputs).
    ref_bf16 = sgc_reference_bf16(x, weight, bias)
    assert jnp.allclose(out, ref_bf16, atol=2e-3, rtol=2e-3), "mismatch vs bf16 ref"

    # Loose check against the full-f32 reference (bf16 input rounding only).
    ref_f32 = sgc_reference_f32(x, weight, bias)
    assert jnp.allclose(out, ref_f32, atol=5e-2, rtol=5e-2), "mismatch vs f32 ref"

    print("KERNEL_OK")
</pallas_src>

<mosaic_0001>
module attributes {stable_mosaic.version = 11 : i64} {
  func.func @_sgc_linear_kernel(%arg0: i32, %arg1: memref<8x128xbf16, #tpu.memory_space<vmem>>, %arg2: memref<128x128xbf16, #tpu.memory_space<vmem>>, %arg3: memref<1x128xf32, #tpu.memory_space<vmem>>, %arg4: memref<8x128xf32, #tpu.memory_space<vmem>>) attributes {dimension_semantics = [#tpu.dimension_semantics<parallel>], iteration_bounds = array<i64: 1>, scalar_prefetch = 0 : i64, scratch_operands = 0 : i64, tpu.core_type = #tpu.core_type<tc>, window_params = [{transform_indices = @transform_0, window_bounds = array<i64: 8, 128>}, {pipeline_mode = #tpu.pipeline_mode<synchronous>, transform_indices = @transform_1, window_bounds = array<i64: 128, 128>}, {pipeline_mode = #tpu.pipeline_mode<synchronous>, transform_indices = @transform_2, window_bounds = array<i64: 1, 128>}, {transform_indices = @transform_3, window_bounds = array<i64: 8, 128>}]} {
    %c0 = arith.constant 0 : index
    %c0_0 = arith.constant 0 : index
    %0 = vector.load %arg1[%c0, %c0_0] : memref<8x128xbf16, #tpu.memory_space<vmem>>, vector<8x128xbf16>
    %c0_1 = arith.constant 0 : index
    %c0_2 = arith.constant 0 : index
    %1 = vector.load %arg2[%c0_1, %c0_2] : memref<128x128xbf16, #tpu.memory_space<vmem>>, vector<128x128xbf16>
    %cst = arith.constant dense<0.000000e+00> : vector<8x128xf32>
    %2 = tpu.matmul %0, %1, %cst {dimension_numbers = #tpu.dot_dimension_numbers<[1], [0], [0], [1], [0, 0, 1, 1], [], []>} : vector<8x128xbf16>, vector<128x128xbf16>, vector<8x128xf32> -> vector<8x128xf32>
    %c0_3 = arith.constant 0 : index
    %c0_4 = arith.constant 0 : index
    %3 = vector.load %arg3[%c0_3, %c0_4] : memref<1x128xf32, #tpu.memory_space<vmem>>, vector<1x128xf32>
    %4 = vector.broadcast %3 : vector<1x128xf32> to vector<8x128xf32>
    %5 = arith.addf %2, %4 : vector<8x128xf32>
    %c0_5 = arith.constant 0 : index
    %c0_6 = arith.constant 0 : index
    %6 = vector.load %arg4[%c0_5, %c0_6] : memref<8x128xf32, #tpu.memory_space<vmem>>, vector<8x128xf32>
    tpu.vector_store %arg4[%c0_5, %c0_6], %5 {strides = array<i32>} : memref<8x128xf32, #tpu.memory_space<vmem>>, vector<8x128xf32>,
    return
  }
  func.func @transform_0(%arg0: i32) -> (i32, i32) {
    %c0_i32 = arith.constant 0 : i32
    %c0_i32_0 = arith.constant 0 : i32
    return %arg0, %c0_i32 : i32, i32
  }
  func.func @transform_1(%arg0: i32) -> (i32, i32) {
    %c0_i32 = arith.constant 0 : i32
    %c0_i32_0 = arith.constant 0 : i32
    %c0_i32_1 = arith.constant 0 : i32
    return %c0_i32, %c0_i32_0 : i32, i32
  }
  func.func @transform_2(%arg0: i32) -> (i32, i32) {
    %c0_i32 = arith.constant 0 : i32
    %c0_i32_0 = arith.constant 0 : i32
    %c0_i32_1 = arith.constant 0 : i32
    return %c0_i32, %c0_i32_0 : i32, i32
  }
  func.func @transform_3(%arg0: i32) -> (i32, i32) {
    %c0_i32 = arith.constant 0 : i32
    %c0_i32_0 = arith.constant 0 : i32
    return %arg0, %c0_i32 : i32, i32
  }
}

</mosaic_0001>

<llo_original>
// kernel: tpu_custom_call.1
$region0: #{tpu_custom_call.1}
  #allocation0 [shape = 'u32[]', space=smem, size = 0x4, offset = 0x4, fixed_abs, tag = 'smem constant byte address 0x4 - core index']
  #allocation1 [shape = 'u32[72,128]{1,0:T(1,128)}', space=vmem, size = 0x9000, scoped, tag = 'internal scratch']
  %s0 = inlined_call_operand.hbm [shape: bf16[8,128], index: 0, kind: input, shape index: {}]
  %s1 = inlined_call_operand.hbm [shape: bf16[128,128], index: 1, kind: input, shape index: {}]
  %s2 = inlined_call_operand.vmem [shape: f32[1,128], index: 2, kind: input, shape index: {}]
  %s3 = inlined_call_operand.hbm [shape: f32[8,128], index: 3, kind: output, shape index: {}]
  %s4 = sld [smem:[#allocation0]]
  $region30: #{tpu_custom_call.1} parent=0
    _
  %s6 = ssub.s32 1, %s4
  %s7 = scalar_select 0, %s6, %s4
  $region1: #{tpu_custom_call.1} parent=0
    #allocation2 [shape = 'u8[2048]{0}', space=vmem, size = 0x800, scoped, tag = 'input window, operand 0, single buffered']
    #allocation3 [shape = 's32[1]{0}', space=sflag, size = 0x4, scoped, tag = 'scoped memory for tpu_custom_call.1']
    #allocation4 [shape = 's32[1]{0}', space=sflag, size = 0x4, scoped, tag = 'scoped memory for tpu_custom_call.1']
    #allocation5 [shape = 'u8[32768]{0}', space=vmem, size = 0x8000, scoped, tag = 'input window, operand 1, single buffered']
    #allocation6 [shape = 's32[1]{0}', space=sflag, size = 0x4, scoped, tag = 'scoped memory for tpu_custom_call.1']
    #allocation7 [shape = 'u8[4096]{0}', space=vmem, size = 0x1000, scoped, tag = 'output window, operand 0, single buffered']
    %8 = vsyncpa [#allocation3], 0
    %9 = vsyncpa [#allocation6], 0
    %10 = vsyncpa [#allocation4], 0
    // Predicated region
    $region2: #{tpu_custom_call.1} parent=1 // pred_check
      _
    $region3: #{tpu_custom_call.1} parent=1 // pred_check_branch
      %12 = sbr.rel (0) target = $region5
    $region4: #{tpu_custom_call.1} parent=1 // pred_region
      %14 = vsyncadd [#allocation3], 0
      %s16 = sshll.u32 %s0, 4
      %s17 = int_to_ptr.hbm [resolvable:$true] %s16
      %s18 = sshll.u32 [#allocation2], 4
      %s19 = int_to_ptr.vmem [resolvable:$true] %s18
      %21 = dma.hbm_to_vmem [thread:$0]  %s17, 64, %s19, [#allocation3]
    $region5: #{tpu_custom_call.1} parent=1 // pred_fallthru
      _
    // Predicated region
    $region6: #{tpu_custom_call.1} parent=1 // pred_check
      _
    $region7: #{tpu_custom_call.1} parent=1 // pred_check_branch
      %23 = sbr.rel (0) target = $region9
    $region8: #{tpu_custom_call.1} parent=1 // pred_region
      %25 = vsyncadd [#allocation6], 0
      %s26 = sshll.u32 %s1, 4
      %s27 = int_to_ptr.hbm [resolvable:$true] %s26
      %s28 = sshll.u32 [#allocation5], 4
      %s29 = int_to_ptr.vmem [resolvable:$true] %s28
      %34 = dma.hbm_to_vmem [thread:$0]  %s27, 1024, %s29, [#allocation6], 64, 64, 4
    $region9: #{tpu_custom_call.1} parent=1 // pred_fallthru
      _
    // Predicated region
    $region10: #{tpu_custom_call.1} parent=1 // pred_check
      _
    $region11: #{tpu_custom_call.1} parent=1 // pred_check_branch
      %36 = sbr.rel (0) target = $region13
    $region12: #{tpu_custom_call.1} parent=1 // pred_region
      _
    $region13: #{tpu_custom_call.1} parent=1 // pred_fallthru
      _
    // Predicated region
    $region14: #{tpu_custom_call.1} parent=1 // pred_check
      _
    $region15: #{tpu_custom_call.1} parent=1 // pred_check_branch
      %38 = sbr.rel (0) target = $region17
    $region16: #{tpu_custom_call.1} parent=1 // pred_region
      %40 = dma.done [#allocation3], 64
    $region17: #{tpu_custom_call.1} parent=1 // pred_fallthru
      _
    // Predicated region
    $region18: #{tpu_custom_call.1} parent=1 // pred_check
      _
    $region19: #{tpu_custom_call.1} parent=1 // pred_check_branch
      %42 = sbr.rel (0) target = $region21
    $region20: #{tpu_custom_call.1} parent=1 // pred_region
      %44 = dma.done [#allocation6], 1024
    $region21: #{tpu_custom_call.1} parent=1 // pred_fallthru
      _
    %v45 = vld [vmem:[#allocation2] sm:$0xf]
    %v46 = vld [vmem:[#allocation5] sm:$0xf]
    %v47 = vld [vmem:[#allocation5 + $0x4] sm:$0xf]
    %v48 = vld [vmem:[#allocation5 + $0x8] sm:$0xf]
    %v49 = vld [vmem:[#allocation5 + $0xc] sm:$0xf]
    %v50 = vld [vmem:[#allocation5 + $0x10] sm:$0xf]
    %v51 = vld [vmem:[#allocation5 + $0x14] sm:$0xf]
    %v52 = vld [vmem:[#allocation5 + $0x18] sm:$0xf]
    %v53 = vld [vmem:[#allocation5 + $0x1c] sm:$0xf]
    %v54 = vld [vmem:[#allocation5 + $0x20] sm:$0xf]
    %v55 = vld [vmem:[#allocation5 + $0x24] sm:$0xf]
    %v56 = vld [vmem:[#allocation5 + $0x28] sm:$0xf]
    %v57 = vld [vmem:[#allocation5 + $0x2c] sm:$0xf]
    %v58 = vld [vmem:[#allocation5 + $0x30] sm:$0xf]
    %v59 = vld [vmem:[#allocation5 + $0x34] sm:$0xf]
    %v60 = vld [vmem:[#allocation5 + $0x38] sm:$0xf]
    %v61 = vld [vmem:[#allocation5 + $0x3c] sm:$0xf]
    %v62 = vld [vmem:[%s2] sm:$0x1]
    %v64 = vperm.slane %v62, 0
    %v82 = vunpack.c.l.b16 %v46
    %v83 = vunpack.c.l.b16 %v47
    %v84 = vunpack.c.l.b16 %v48
    %v85 = vunpack.c.l.b16 %v49
    %v86 = vunpack.c.l.b16 %v50
    %v87 = vunpack.c.l.b16 %v51
    %v88 = vunpack.c.l.b16 %v52
    %v89 = vunpack.c.l.b16 %v53
    %v90 = vunpack.c.l.b16 %v54
    %v91 = vunpack.c.l.b16 %v55
    %v92 = vunpack.c.l.b16 %v56
    %v93 = vunpack.c.l.b16 %v57
    %v94 = vunpack.c.l.b16 %v58
    %v95 = vunpack.c.l.b16 %v59
    %v96 = vunpack.c.l.b16 %v60
    %v97 = vunpack.c.l.b16 %v61
    %v98 = vpack.c.b16 %v83, %v82
    %v99 = vpack.c.b16 %v85, %v84
    %v100 = vpack.c.b16 %v87, %v86
    %v101 = vpack.c.b16 %v89, %v88
    %v102 = vpack.c.b16 %v91, %v90
    %v103 = vpack.c.b16 %v93, %v92
    %v104 = vpack.c.b16 %v95, %v94
    %v105 = vpack.c.b16 %v97, %v96
    %114 = vmatpush.bf16.msra.mxu0 %v105
    %115 = vmatpush.bf16.msra.mxu0 %v104
    %116 = vmatpush.bf16.msra.mxu0 %v103
    %117 = vmatpush.bf16.msra.mxu0 %v102
    %118 = vmatpush.bf16.msra.mxu0 %v101
    %119 = vmatpush.bf16.msra.mxu0 %v100
    %120 = vmatpush.bf16.msra.mxu0 %v99
    %121 = vmatpush.bf16.msra.mxu0 %v98
    %122 = vmatmul.bf16.gmra.mxu0 %v45
    %v123 = vpop.f32.mrf.mxu0
    %v124 = vadd.f32 %v64, %v123
    %v125 = vpop.f32.mrf.mxu0
    %126 = vdwg.mxu0
    %127 = vst [vmem:[#allocation7] sm:$0xff] %v124
    // Predicated region
    $region22: #{tpu_custom_call.1} parent=1 // pred_check
      _
    $region23: #{tpu_custom_call.1} parent=1 // pred_check_branch
      %129 = sbr.rel (0) target = $region25
    $region24: #{tpu_custom_call.1} parent=1 // pred_region
      %131 = vsyncadd [#allocation4], 0
      %s133 = sshll.u32 [#allocation7], 4
      %s134 = int_to_ptr.vmem [resolvable:$true] %s133
      %s135 = sshll.u32 %s3, 4
      %s136 = int_to_ptr.hbm [resolvable:$true] %s135
      %138 = dma.vmem_to_hbm [thread:$0]  %s134, 128, %s136, [#allocation4]
    $region25: #{tpu_custom_call.1} parent=1 // pred_fallthru
      _
    // Predicated region
    $region26: #{tpu_custom_call.1} parent=1 // pred_check
      _
    $region27: #{tpu_custom_call.1} parent=1 // pred_check_branch
      %140 = sbr.rel (0) target = $region29
    $region28: #{tpu_custom_call.1} parent=1 // pred_region
      %142 = dma.done [#allocation4], 128
    $region29: #{tpu_custom_call.1} parent=1 // pred_fallthru
      _
    %143 = vsyncpa [#allocation3], 1
    %144 = vsyncpa [#allocation6], 1
    %145 = vsyncpa [#allocation4], 1

</llo_original>
